<compile_context>
chip_gen: v7x
topology: tpu7x:2x2x1
jax: 0.10.0
libtpu: 0.0.40
codegen_flags: <defaults>
</compile_context>

<pallas_src>
import functools

import numpy as np
import jax
import jax.numpy as jnp
from jax.experimental import pallas as pl
from jax.experimental.pallas import tpu as pltpu


# ----------------------------------------------------------------------------
# Pallas kernel: one pid-tile of  logits = x @ F^T, 1/temp scale, masked
# online-softmax cross-entropy accumulation.
# ----------------------------------------------------------------------------
def _mdm_loss_kernel(meta_ref, x_ref, f_ref, tgt_ref, o_ref,
                     m_sc, l_sc, t_sc, *, inv_temp, tile_p):
    k = pl.program_id(0)

    @pl.when(k == 0)
    def _init():
        m_sc[...] = jnp.full_like(m_sc, -jnp.inf)
        l_sc[...] = jnp.zeros_like(l_sc)
        t_sc[...] = jnp.zeros_like(t_sc)

    start = meta_ref[0]          # first pid of the domain slice (absolute)
    end = meta_ref[1]            # one past the last pid (absolute)
    first_blk = meta_ref[2]      # block index of the first streamed tile

    x = x_ref[...]               # (B, D)  bf16
    f = f_ref[...]               # (TP, D) bf16  (one tile of the memory bank)

    # logits[b, p] = sum_d x[b, d] * f[p, d]  -> (B, TP), MXU, f32 accumulation
    logits = jax.lax.dot_general(
        x, f, (((1,), (1,)), ((), ())), preferred_element_type=jnp.float32)
    logits = logits * jnp.float32(inv_temp)

    # Absolute pid ids of this tile's columns; mask columns outside [start, end).
    col0 = (first_blk + k) * tile_p
    col_ids = col0 + jax.lax.broadcasted_iota(jnp.int32, logits.shape, 1)
    in_dom = (col_ids >= start) & (col_ids < end)
    masked = jnp.where(in_dom, logits, jnp.float32(-1e30))   # applied in f32

    # Online softmax update (exp(-1e30 - m) underflows to 0, no second mask).
    m_prev = m_sc[...]
    m_new = jnp.maximum(m_prev, jnp.max(masked, axis=1, keepdims=True))
    alpha = jnp.exp(m_prev - m_new)
    p = jnp.exp(masked - m_new)
    l_sc[...] = alpha * l_sc[...] + jnp.sum(p, axis=1, keepdims=True)
    m_sc[...] = m_new

    # Target logit via select-and-sum (targets always fall inside the slice).
    t_sc[...] += jnp.sum(jnp.where(col_ids == tgt_ref[...], logits, 0.0),
                         axis=1, keepdims=True)

    @pl.when(k == pl.num_programs(0) - 1)
    def _finalize():
        # per-row cross-entropy = logsumexp(domain logits) - target logit
        o_ref[...] = m_sc[...] + jnp.log(l_sc[...]) - t_sc[...]


def _mdm_loss_pallas(inputs, features_bf16, targets, start, length, temp,
                     *, tile_p):
    B, D = inputs.shape
    P = features_bf16.shape[0]
    assert tile_p == P or (tile_p % 16 == 0 and P % tile_p == 0), \
        "tile_p must divide the bank and be a multiple of 16 (bf16 sublanes)"

    end = start + length
    first_blk = start // tile_p
    last_blk = (end - 1) // tile_p
    n_tiles = last_blk - first_blk + 1          # only tiles overlapping the slice

    meta = jnp.array([start, end, first_blk], dtype=jnp.int32)
    tgt2d = targets.astype(jnp.int32).reshape(B, 1)

    grid_spec = pltpu.PrefetchScalarGridSpec(
        num_scalar_prefetch=1,
        grid=(n_tiles,),
        in_specs=[
            pl.BlockSpec((B, D), lambda k, meta: (0, 0)),                 # inputs
            pl.BlockSpec((tile_p, D), lambda k, meta: (meta[2] + k, 0)),  # bank tile
            pl.BlockSpec((B, 1), lambda k, meta: (0, 0)),                 # targets
        ],
        out_specs=pl.BlockSpec((B, 1), lambda k, meta: (0, 0)),
        scratch_shapes=[pltpu.VMEM((B, 1), jnp.float32),   # running max
                        pltpu.VMEM((B, 1), jnp.float32),   # running sum
                        pltpu.VMEM((B, 1), jnp.float32)],  # target logit
    )

    per_row = pl.pallas_call(
        functools.partial(_mdm_loss_kernel,
                          inv_temp=1.0 / float(temp), tile_p=tile_p),
        out_shape=jax.ShapeDtypeStruct((B, 1), jnp.float32),
        grid_spec=grid_spec,
        compiler_params=pltpu.CompilerParams(
            dimension_semantics=("arbitrary",),        # pid axis is a reduction
            vmem_limit_bytes=32 << 20),
    )(meta, inputs.astype(jnp.bfloat16), features_bf16, tgt2d)

    return jnp.mean(per_row[:, 0])                     # batch mean in JAX


# ----------------------------------------------------------------------------
# Python-side module equivalent.
# ----------------------------------------------------------------------------
class MixtureDomainMemoryJAX:
    def __init__(self, num_features, num_domains, domain_pids, temp=0.05,
                 margin=0.0, momentum=0.2, num_instances=4, tile_p=512):
        assert len(domain_pids) == num_domains
        self.num_features = num_features
        self.num_domains = num_domains
        self.domain_pids = list(domain_pids)
        self.pid_sum = [0]
        s = 0
        for n in domain_pids:
            s += n
            self.pid_sum.append(s)
        self.num_pids = self.pid_sum[-1]
        self.temp = temp
        self.margin = margin
        self.momentum = momentum
        self.num_instances = num_instances
        self.tile_p = min(tile_p, self.num_pids)
        # register_buffer('features', zeros(num_pids, num_features)) -- filled by init()
        self.features = jnp.zeros((self.num_pids, num_features), jnp.float32)
        self.features_bf16 = self.features.astype(jnp.bfloat16)
        self.labels = jnp.zeros((self.num_pids,), jnp.int32)

    def init(self, features, labels):
        assert features.shape == self.features.shape
        self.features = features
        self.features_bf16 = features.astype(jnp.bfloat16)  # bf16 shadow for forward
        self.labels = labels

    def forward(self, inputs, targets, domain_idx, iter=0):
        # dynamic_momentum / decay only matter for the backward momentum update.
        if 0 <= domain_idx < self.num_domains:
            start = self.pid_sum[domain_idx]
            length = self.domain_pids[domain_idx]
        elif domain_idx == -1:
            start, length = 0, self.num_pids
        else:
            # TODO(synk): domain_idx in {-2..-7} use host-side np.random.choice /
            # torch.topk column sampling; no clean Pallas equivalent implemented.
            raise NotImplementedError(
                "random-sampling domain_idx branches not implemented")

        # margin == 0 -> no cosSoftmax branch
        return _mdm_loss_pallas(inputs, self.features_bf16, targets,
                                start, length, self.temp, tile_p=self.tile_p)


# Pure-JAX reference of the same forward (bf16-rounded operands, f32 math).
def _reference_loss(inputs, features, targets, start, length, temp):
    x = inputs.astype(jnp.bfloat16).astype(jnp.float32)
    f = features.astype(jnp.bfloat16).astype(jnp.float32)
    logits = (x @ f.T) / temp
    sub = logits[:, start:start + length]
    t_new = targets - start
    logp = jax.nn.log_softmax(sub, axis=1)
    return -jnp.mean(logp[jnp.arange(x.shape[0]), t_new])


if __name__ == "__main__":
    # Small, module-consistent shapes; tile_p=32 so multi-tile streaming and
    # unaligned domain starts are actually exercised.
    num_features = 32
    domain_pids = [48, 48, 32]          # num_pids = 128, domain 1 starts at 48 (unaligned)
    num_domains = len(domain_pids)
    num_instances = 4
    n_ids_in_batch = 2
    batch = n_ids_in_batch * num_instances   # 8
    temp = 0.05

    mem = MixtureDomainMemoryJAX(num_features, num_domains, domain_pids,
                                 temp=temp, num_instances=num_instances,
                                 tile_p=32)

    key = jax.random.PRNGKey(0)
    k_feat, k_in = jax.random.split(key)

    # Deterministic memory-bank init (row-normalized unit features).
    feats = jax.random.normal(k_feat, (mem.num_pids, num_features), jnp.float32)
    feats = feats / jnp.linalg.norm(feats, axis=1, keepdims=True)
    labels = jnp.arange(mem.num_pids, dtype=jnp.int32)
    mem.init(feats, labels)

    inputs = jax.random.normal(k_in, (batch, num_features), jnp.float32)
    inputs = inputs / jnp.linalg.norm(inputs, axis=1, keepdims=True)

    # (domain_idx, pids-in-that-domain): aligned start, unaligned start,
    # last domain, and the full-bank (-1) path.
    cases = [
        (0, [3, 17]),
        (1, [50, 90]),
        (2, [96, 120]),
        (-1, [3, 90]),
    ]

    for domain_idx, pids in cases:
        targets = jnp.asarray(np.repeat(np.array(pids, np.int32), num_instances))
        loss = jax.block_until_ready(mem.forward(inputs, targets, domain_idx))

        if domain_idx == -1:
            start, length = 0, mem.num_pids
        else:
            start, length = mem.pid_sum[domain_idx], mem.domain_pids[domain_idx]
        ref = jax.block_until_ready(
            _reference_loss(inputs, feats, targets, start, length, temp))

        assert np.allclose(np.asarray(loss), np.asarray(ref),
                           rtol=2e-3, atol=2e-3), (domain_idx, loss, ref)

    print("KERNEL_OK")
</pallas_src>

<mosaic_0001>
module attributes {stable_mosaic.version = 11 : i64} {
  func.func @_mdm_loss_kernel(%arg0: i32, %arg1: memref<3xi32, #tpu.memory_space<smem>>, %arg2: memref<8x32xbf16, #tpu.memory_space<vmem>>, %arg3: memref<32x32xbf16, #tpu.memory_space<vmem>>, %arg4: memref<8x1xi32, #tpu.memory_space<vmem>>, %arg5: memref<8x1xf32, #tpu.memory_space<vmem>>, %arg6: memref<8x1xf32, #tpu.memory_space<vmem>>, %arg7: memref<8x1xf32, #tpu.memory_space<vmem>>, %arg8: memref<8x1xf32, #tpu.memory_space<vmem>>) attributes {dimension_semantics = [#tpu.dimension_semantics<arbitrary>], iteration_bounds = array<i64: 2>, scalar_prefetch = 1 : i64, scratch_operands = 3 : i64, tpu.core_type = #tpu.core_type<tc>, window_params = [{pipeline_mode = #tpu.pipeline_mode<synchronous>, transform_indices = @transform_0, window_bounds = array<i64: 8, 32>}, {transform_indices = @transform_1, window_bounds = array<i64: 32, 32>}, {pipeline_mode = #tpu.pipeline_mode<synchronous>, transform_indices = @transform_2, window_bounds = array<i64: 8, 1>}, {pipeline_mode = #tpu.pipeline_mode<synchronous>, transform_indices = @transform_3, window_bounds = array<i64: 8, 1>}]} {
    %c0_i32 = arith.constant 0 : i32
    %0 = arith.cmpi eq, %arg0, %c0_i32 : i32
    %1 = arith.extui %0 : i1 to i32
    %c0_i32_0 = arith.constant 0 : i32
    %2 = arith.cmpi ne, %1, %c0_i32_0 : i32
    scf.if %2 {
      %cst_26 = arith.constant 0xFF800000 : f32
      %52 = vector.broadcast %cst_26 : f32 to vector<8x1xf32>
      %c0_27 = arith.constant 0 : index
      %c0_28 = arith.constant 0 : index
      %53 = vector.load %arg6[%c0_27, %c0_28] : memref<8x1xf32, #tpu.memory_space<vmem>>, vector<8x1xf32>
      tpu.vector_store %arg6[%c0_27, %c0_28], %52 {strides = array<i32>} : memref<8x1xf32, #tpu.memory_space<vmem>>, vector<8x1xf32>,
      %cst_29 = arith.constant 0.000000e+00 : f32
      %54 = vector.broadcast %cst_29 : f32 to vector<8x1xf32>
      %c0_30 = arith.constant 0 : index
      %c0_31 = arith.constant 0 : index
      %55 = vector.load %arg7[%c0_30, %c0_31] : memref<8x1xf32, #tpu.memory_space<vmem>>, vector<8x1xf32>
      tpu.vector_store %arg7[%c0_30, %c0_31], %54 {strides = array<i32>} : memref<8x1xf32, #tpu.memory_space<vmem>>, vector<8x1xf32>,
      %cst_32 = arith.constant 0.000000e+00 : f32
      %56 = vector.broadcast %cst_32 : f32 to vector<8x1xf32>
      %c0_33 = arith.constant 0 : index
      %c0_34 = arith.constant 0 : index
      %57 = vector.load %arg8[%c0_33, %c0_34] : memref<8x1xf32, #tpu.memory_space<vmem>>, vector<8x1xf32>
      tpu.vector_store %arg8[%c0_33, %c0_34], %56 {strides = array<i32>} : memref<8x1xf32, #tpu.memory_space<vmem>>, vector<8x1xf32>,
    } else {
    }
    %c0 = arith.constant 0 : index
    %3 = memref.load %arg1[%c0] : memref<3xi32, #tpu.memory_space<smem>>
    %c1 = arith.constant 1 : index
    %4 = memref.load %arg1[%c1] : memref<3xi32, #tpu.memory_space<smem>>
    %c2 = arith.constant 2 : index
    %5 = memref.load %arg1[%c2] : memref<3xi32, #tpu.memory_space<smem>>
    %c0_1 = arith.constant 0 : index
    %c0_2 = arith.constant 0 : index
    %6 = vector.load %arg2[%c0_1, %c0_2] : memref<8x32xbf16, #tpu.memory_space<vmem>>, vector<8x32xbf16>
    %c0_3 = arith.constant 0 : index
    %c0_4 = arith.constant 0 : index
    %7 = vector.load %arg3[%c0_3, %c0_4] : memref<32x32xbf16, #tpu.memory_space<vmem>>, vector<32x32xbf16>
    %cst = arith.constant dense<0.000000e+00> : vector<8x32xf32>
    %8 = tpu.matmul %6, %7, %cst {dimension_numbers = #tpu.dot_dimension_numbers<[1], [1], [0], [0], [0, 0, 1, 0], [], []>} : vector<8x32xbf16>, vector<32x32xbf16>, vector<8x32xf32> -> vector<8x32xf32>
    %cst_5 = arith.constant 2.000000e+01 : f32
    %9 = vector.broadcast %cst_5 : f32 to vector<8x32xf32>
    %10 = arith.mulf %8, %9 : vector<8x32xf32>
    %11 = arith.addi %5, %arg0 : i32
    %c32_i32 = arith.constant 32 : i32
    %12 = arith.muli %11, %c32_i32 : i32
    %13 = tpu.iota {dimensions = array<i32: 1>} : vector<8x32xi32>
    %14 = vector.broadcast %12 : i32 to vector<8x32xi32>
    %15 = arith.addi %14, %13 : vector<8x32xi32>
    %16 = vector.broadcast %3 : i32 to vector<8x32xi32>
    %17 = arith.cmpi sge, %15, %16 : vector<8x32xi32>
    %18 = vector.broadcast %4 : i32 to vector<8x32xi32>
    %19 = arith.cmpi slt, %15, %18 : vector<8x32xi32>
    %20 = arith.andi %17, %19 : vector<8x32xi1>
    %cst_6 = arith.constant -1.000000e+30 : f32
    %21 = vector.broadcast %cst_6 : f32 to vector<8x32xf32>
    %22 = arith.select %20, %10, %21 : vector<8x32xi1>, vector<8x32xf32>
    %c0_7 = arith.constant 0 : index
    %c0_8 = arith.constant 0 : index
    %23 = vector.load %arg6[%c0_7, %c0_8] : memref<8x1xf32, #tpu.memory_space<vmem>>, vector<8x1xf32>
    %cst_9 = arith.constant dense<0xFF800000> : vector<8xf32>
    %24 = vector.multi_reduction <maximumf>, %22, %cst_9 [1] : vector<8x32xf32> to vector<8xf32>
    %25 = vector.shape_cast %24 : vector<8xf32> to vector<8x1xf32>
    %26 = arith.maximumf %23, %25 : vector<8x1xf32>
    %27 = arith.subf %23, %26 : vector<8x1xf32>
    %28 = math.exp %27 : vector<8x1xf32>
    %29 = vector.broadcast %26 : vector<8x1xf32> to vector<8x32xf32>
    %30 = arith.subf %22, %29 : vector<8x32xf32>
    %31 = math.exp %30 : vector<8x32xf32>
    %c0_10 = arith.constant 0 : index
    %c0_11 = arith.constant 0 : index
    %32 = vector.load %arg7[%c0_10, %c0_11] : memref<8x1xf32, #tpu.memory_space<vmem>>, vector<8x1xf32>
    %33 = arith.mulf %28, %32 : vector<8x1xf32>
    %cst_12 = arith.constant dense<0.000000e+00> : vector<8xf32>
    %34 = vector.multi_reduction <add>, %31, %cst_12 [1] : vector<8x32xf32> to vector<8xf32>
    %35 = vector.shape_cast %34 : vector<8xf32> to vector<8x1xf32>
    %36 = arith.addf %33, %35 : vector<8x1xf32>
    %c0_13 = arith.constant 0 : index
    %c0_14 = arith.constant 0 : index
    %37 = vector.load %arg7[%c0_13, %c0_14] : memref<8x1xf32, #tpu.memory_space<vmem>>, vector<8x1xf32>
    tpu.vector_store %arg7[%c0_13, %c0_14], %36 {strides = array<i32>} : memref<8x1xf32, #tpu.memory_space<vmem>>, vector<8x1xf32>,
    %c0_15 = arith.constant 0 : index
    %c0_16 = arith.constant 0 : index
    %38 = vector.load %arg6[%c0_15, %c0_16] : memref<8x1xf32, #tpu.memory_space<vmem>>, vector<8x1xf32>
    tpu.vector_store %arg6[%c0_15, %c0_16], %26 {strides = array<i32>} : memref<8x1xf32, #tpu.memory_space<vmem>>, vector<8x1xf32>,
    %c0_17 = arith.constant 0 : index
    %c0_18 = arith.constant 0 : index
    %39 = vector.load %arg8[%c0_17, %c0_18] : memref<8x1xf32, #tpu.memory_space<vmem>>, vector<8x1xf32>
    %c0_19 = arith.constant 0 : index
    %c0_20 = arith.constant 0 : index
    %40 = vector.load %arg4[%c0_19, %c0_20] : memref<8x1xi32, #tpu.memory_space<vmem>>, vector<8x1xi32>
    %41 = vector.broadcast %40 : vector<8x1xi32> to vector<8x32xi32>
    %42 = arith.cmpi eq, %15, %41 : vector<8x32xi32>
    %cst_21 = arith.constant 0.000000e+00 : f32
    %43 = vector.broadcast %cst_21 : f32 to vector<8x32xf32>
    %44 = arith.select %42, %10, %43 : vector<8x32xi1>, vector<8x32xf32>
    %cst_22 = arith.constant dense<0.000000e+00> : vector<8xf32>
    %45 = vector.multi_reduction <add>, %44, %cst_22 [1] : vector<8x32xf32> to vector<8xf32>
    %46 = vector.shape_cast %45 : vector<8xf32> to vector<8x1xf32>
    %47 = arith.addf %39, %46 : vector<8x1xf32>
    %c0_23 = arith.constant 0 : index
    %c0_24 = arith.constant 0 : index
    %48 = vector.load %arg8[%c0_23, %c0_24] : memref<8x1xf32, #tpu.memory_space<vmem>>, vector<8x1xf32>
    tpu.vector_store %arg8[%c0_23, %c0_24], %47 {strides = array<i32>} : memref<8x1xf32, #tpu.memory_space<vmem>>, vector<8x1xf32>,
    %c1_i32 = arith.constant 1 : i32
    %49 = arith.cmpi eq, %arg0, %c1_i32 : i32
    %50 = arith.extui %49 : i1 to i32
    %c0_i32_25 = arith.constant 0 : i32
    %51 = arith.cmpi ne, %50, %c0_i32_25 : i32
    scf.if %51 {
      %c0_26 = arith.constant 0 : index
      %c0_27 = arith.constant 0 : index
      %52 = vector.load %arg6[%c0_26, %c0_27] : memref<8x1xf32, #tpu.memory_space<vmem>>, vector<8x1xf32>
      %c0_28 = arith.constant 0 : index
      %c0_29 = arith.constant 0 : index
      %53 = vector.load %arg7[%c0_28, %c0_29] : memref<8x1xf32, #tpu.memory_space<vmem>>, vector<8x1xf32>
      %54 = math.log %53 : vector<8x1xf32>
      %55 = arith.addf %52, %54 : vector<8x1xf32>
      %c0_30 = arith.constant 0 : index
      %c0_31 = arith.constant 0 : index
      %56 = vector.load %arg8[%c0_30, %c0_31] : memref<8x1xf32, #tpu.memory_space<vmem>>, vector<8x1xf32>
      %57 = arith.subf %55, %56 : vector<8x1xf32>
      %c0_32 = arith.constant 0 : index
      %c0_33 = arith.constant 0 : index
      %58 = vector.load %arg5[%c0_32, %c0_33] : memref<8x1xf32, #tpu.memory_space<vmem>>, vector<8x1xf32>
      tpu.vector_store %arg5[%c0_32, %c0_33], %57 {strides = array<i32>} : memref<8x1xf32, #tpu.memory_space<vmem>>, vector<8x1xf32>,
    } else {
    }
    return
  }
  func.func @transform_0(%arg0: i32, %arg1: memref<3xi32, #tpu.memory_space<smem>>) -> (i32, i32) {
    %c0_i32 = arith.constant 0 : i32
    %c0_i32_0 = arith.constant 0 : i32
    %c0_i32_1 = arith.constant 0 : i32
    return %c0_i32, %c0_i32_0 : i32, i32
  }
  func.func @transform_1(%arg0: i32, %arg1: memref<3xi32, #tpu.memory_space<smem>>) -> (i32, i32) {
    %c2 = arith.constant 2 : index
    %0 = memref.load %arg1[%c2] : memref<3xi32, #tpu.memory_space<smem>>
    %1 = arith.addi %0, %arg0 : i32
    %c0_i32 = arith.constant 0 : i32
    %c0_i32_0 = arith.constant 0 : i32
    return %1, %c0_i32 : i32, i32
  }
  func.func @transform_2(%arg0: i32, %arg1: memref<3xi32, #tpu.memory_space<smem>>) -> (i32, i32) {
    %c0_i32 = arith.constant 0 : i32
    %c0_i32_0 = arith.constant 0 : i32
    %c0_i32_1 = arith.constant 0 : i32
    return %c0_i32, %c0_i32_0 : i32, i32
  }
  func.func @transform_3(%arg0: i32, %arg1: memref<3xi32, #tpu.memory_space<smem>>) -> (i32, i32) {
    %c0_i32 = arith.constant 0 : i32
    %c0_i32_0 = arith.constant 0 : i32
    %c0_i32_1 = arith.constant 0 : i32
    return %c0_i32, %c0_i32_0 : i32, i32
  }
}

</mosaic_0001>

<llo_original>
// kernel: tpu_custom_call.1
$region0: #{tpu_custom_call.1}
  #allocation0 [shape = 'u32[]', space=smem, size = 0x4, offset = 0x4, fixed_abs, tag = 'smem constant byte address 0x4 - core index']
  #allocation1 [shape = 'u32[144,128]{1,0:T(1,128)}', space=vmem, size = 0x12000, scoped, tag = 'internal scratch']
  #allocation2 [shape = 'f32[8,1]{1,0:T(8,128)}', space=vmem, size = 0x1000, scoped, tag = 'scratch operand']
  #allocation3 [shape = 'f32[8,1]{1,0:T(8,128)}', space=vmem, size = 0x1000, scoped, tag = 'scratch operand']
  #allocation4 [shape = 'f32[8,1]{1,0:T(8,128)}', space=vmem, size = 0x1000, scoped, tag = 'scratch operand']
  #allocation5 [shape = 's32[1]{0}', space=sflag, size = 0x4, scoped, tag = 'scoped memory for tpu_custom_call.1']
  #allocation6 [shape = 'u8[512]{0}', space=smem, size = 0x200, scoped, tag = 'prefetched SMEM operand 0']
  %s0 = inlined_call_operand.vmem [shape: s32[3], index: 0, kind: input, shape index: {}]
  %s1 = inlined_call_operand.vmem [shape: bf16[8,32], index: 1, kind: input, shape index: {}]
  %s2 = inlined_call_operand.vmem [shape: bf16[128,32], index: 2, kind: input, shape index: {}]
  %s3 = inlined_call_operand.vmem [shape: s32[8,1], index: 3, kind: input, shape index: {}]
  %s4 = inlined_call_operand.vmem [shape: f32[8,1], index: 4, kind: output, shape index: {}]
  %s5 = sld [smem:[#allocation0]]
  $region53: #{tpu_custom_call.1} parent=0
    _
  %s7 = ssub.s32 1, %s5
  %s8 = scalar_select 0, %s7, %s5
  %s9 = sshll.u32 %s0, 4
  %s10 = int_to_ptr.vmem [resolvable:$true] %s9
  %12 = dma.vmem_to_smem %s10, 16, [#allocation6], [#allocation5]
  %13 = dma.done [#allocation5], 16
  %14 = sfence
  loop: start=0, step=1, limit=4
  $region2: #{tpu_custom_call.1} parent=0 // loop_pre_header
    _
  $region3: #{tpu_custom_call.1} parent=0 // loop_header
    %s16 = sphi 0, %s20
    %p17 = scmp.ge.s32.totalorder %s16, 4
    %s24 = sphi 0, %s24
    %s26 = sphi 0, %s24
    %s27 = sphi 0, %s26
    %s41 = sphi 0, %s27
    %s51 = sphi 0, %s53
    %s54 = sphi 0, %s51
    %s55 = sphi 0, %s54
    %s71 = sphi 0, %s55
    %s75 = sphi 0, %s75
    %s77 = sphi 0, %s75
    %s78 = sphi 0, %s77
    %s92 = sphi 0, %s78
    %s96 = sphi 0, %s96
    %s98 = sphi 0, %s96
    %s99 = sphi 0, %s98
    %s113 = sphi 0, %s99
  $region4: #{tpu_custom_call.1} parent=0 // loop_header_branch
    %19 = sbr.rel (%p17) target = $region8
  $region5: #{tpu_custom_call.1} parent=0 // loop_body
    %s21 = ssub.s32 %s16, 1
    %s22 = ssub.s32 %s16, 2
    %s23 = sadd.s32 %s16, 1
    %s25 = sadd.s32 %s24, 1
    %p28 = scmp.eq.s32.totalorder %s16, 1
    %p29 = scmp.ne.s32.totalorder %s24, %s26
    %p30 = scmp.eq.s32.totalorder %s16, 0
    %p31 = por %p29, %p30
    %p32 = scmp.ne.s32.totalorder %s24, %s26
    %p33 = scmp.eq.s32.totalorder %s21, 1
    %p34 = por %p32, %p33
    %p35 = scmp.ne.s32.totalorder %s26, %s27
    %p36 = scmp.eq.s32.totalorder %s21, 0
    %p37 = por %p35, %p36
    %p38 = scmp.ne.s32.totalorder %s26, %s27
    %p39 = scmp.eq.s32.totalorder %s22, 1
    %p40 = por %p38, %p39
    %p42 = scmp.ne.s32.totalorder %s27, %s41
    %p43 = scmp.eq.s32.totalorder %s22, 0
    %p44 = por %p42, %p43
    %s45 = sld [smem:[#allocation6 + $0x2]]
    %s46 = sadd.s32 %s45, %s16
    %s47 = sld [smem:[#allocation6 + $0x2]]
    %s48 = sadd.s32 %s47, %s23
    %s49 = ssub.s32 %s46, %s48
    %p50 = scmp.eq.s32.totalorder %s49, 0
    %s52 = sadd.s32 %s51, 1
    %s53 = scalar_select %p50, %s51, %s52
    %p56 = pneg %p50
    %p57 = scmp.eq.s32.totalorder %s16, 1
    %p58 = por %p56, %p57
    %p59 = scmp.ne.s32.totalorder %s51, %s54
    %p60 = scmp.eq.s32.totalorder %s16, 0
    %p61 = por %p59, %p60
    %p62 = scmp.ne.s32.totalorder %s51, %s54
    %p63 = scmp.eq.s32.totalorder %s21, 1
    %p64 = por %p62, %p63
    %p65 = scmp.ne.s32.totalorder %s54, %s55
    %p66 = scmp.eq.s32.totalorder %s21, 0
    %p67 = por %p65, %p66
    %p68 = scmp.ne.s32.totalorder %s54, %s55
    %p69 = scmp.eq.s32.totalorder %s22, 1
    %p70 = por %p68, %p69
    %p72 = scmp.ne.s32.totalorder %s55, %s71
    %p73 = scmp.eq.s32.totalorder %s22, 0
    %p74 = por %p72, %p73
    %s76 = sadd.s32 %s75, 1
    %p79 = scmp.eq.s32.totalorder %s16, 1
    %p80 = scmp.ne.s32.totalorder %s75, %s77
    %p81 = scmp.eq.s32.totalorder %s16, 0
    %p82 = por %p80, %p81
    %p83 = scmp.ne.s32.totalorder %s75, %s77
    %p84 = scmp.eq.s32.totalorder %s21, 1
    %p85 = por %p83, %p84
    %p86 = scmp.ne.s32.totalorder %s77, %s78
    %p87 = scmp.eq.s32.totalorder %s21, 0
    %p88 = por %p86, %p87
    %p89 = scmp.ne.s32.totalorder %s77, %s78
    %p90 = scmp.eq.s32.totalorder %s22, 1
    %p91 = por %p89, %p90
    %p93 = scmp.ne.s32.totalorder %s78, %s92
    %p94 = scmp.eq.s32.totalorder %s22, 0
    %p95 = por %p93, %p94
    %s97 = sadd.s32 %s96, 1
    %p100 = scmp.eq.s32.totalorder %s16, 1
    %p101 = scmp.ne.s32.totalorder %s96, %s98
    %p102 = scmp.eq.s32.totalorder %s16, 0
    %p103 = por %p101, %p102
    %p104 = scmp.ne.s32.totalorder %s96, %s98
    %p105 = scmp.eq.s32.totalorder %s21, 1
    %p106 = por %p104, %p105
    %p107 = scmp.ne.s32.totalorder %s98, %s99
    %p108 = scmp.eq.s32.totalorder %s21, 0
    %p109 = por %p107, %p108
    %p110 = scmp.ne.s32.totalorder %s98, %s99
    %p111 = scmp.eq.s32.totalorder %s22, 1
    %p112 = por %p110, %p111
    %p114 = scmp.ne.s32.totalorder %s99, %s113
    %p115 = scmp.eq.s32.totalorder %s22, 0
    %p116 = por %p114, %p115
    %p117 = scmp.le.s32.totalorder 1, %s16
    %p118 = scmp.lt.s32.totalorder %s16, 3
    %p119 = pnand %p117, %p118
    %p120 = pneg %p119
    // Predicated region
    $region9: #{tpu_custom_call.1} parent=5 // pred_check
      _
    $region10: #{tpu_custom_call.1} parent=5 // pred_check_branch
      %122 = sbr.rel (%p119) target = $region12
    $region11: #{tpu_custom_call.1} parent=5 // pred_region
      %s123 = ssub.s32 %s16, 1
      // Predicated region
      $region13: #{tpu_custom_call.1} parent=11 // pred_check
        %p124 = pneg %p37
      $region14: #{tpu_custom_call.1} parent=11 // pred_check_branch
        %126 = sbr.rel (%p124) target = $region16
      $region15: #{tpu_custom_call.1} parent=11 // pred_region
        _
      $region16: #{tpu_custom_call.1} parent=11 // pred_fallthru
        _
      // Predicated region
      $region17: #{tpu_custom_call.1} parent=11 // pred_check
        %p127 = pneg %p88
      $region18: #{tpu_custom_call.1} parent=11 // pred_check_branch
        %129 = sbr.rel (%p127) target = $region20
      $region19: #{tpu_custom_call.1} parent=11 // pred_region
        _
      $region20: #{tpu_custom_call.1} parent=11 // pred_fallthru
        _
    $region12: #{tpu_custom_call.1} parent=5 // pred_fallthru
      _
    %p130 = scmp.lt.s32.totalorder %s16, 2
    // Predicated region
    $region21: #{tpu_custom_call.1} parent=5 // pred_check
      %p131 = pneg %p130
    $region22: #{tpu_custom_call.1} parent=5 // pred_check_branch
      %133 = sbr.rel (%p131) target = $region24
    $region23: #{tpu_custom_call.1} parent=5 // pred_region
      // Predicated region
      $region25: #{tpu_custom_call.1} parent=23 // pred_check
        %p134 = pneg %p61
      $region26: #{tpu_custom_call.1} parent=23 // pred_check_branch
        %136 = sbr.rel (%p134) target = $region28
      $region27: #{tpu_custom_call.1} parent=23 // pred_region
        %s137 = sld [smem:[#allocation6 + $0x2]]
        %s138 = sadd.s32 %s137, %s16
        %s139 = smul.u32 4, %s138
        %p140 = scmp.lt.s32.totalorder %s139, 15
        %s141 = scalar_select %p140, %s139, 15
        %s142 = smul.addr %s141, 4
        %s143 = scalar_lea.vmem %s2, %s142
        %s144 = sld [smem:[#allocation6 + $0x2]]
        %s145 = sadd.s32 %s144, %s16
        %s146 = smul.u32 4, %s145
      $region28: #{tpu_custom_call.1} parent=23 // pred_fallthru
        _
    $region24: #{tpu_custom_call.1} parent=5 // pred_fallthru
      _
    %p147 = scmp.le.s32.totalorder 1, %s16
    %p148 = scmp.lt.s32.totalorder %s16, 3
    %p149 = pnand %p147, %p148
    %p150 = pneg %p149
    // Predicated region
    $region29: #{tpu_custom_call.1} parent=5 // pred_check
      _
    $region30: #{tpu_custom_call.1} parent=5 // pred_check_branch
      %152 = sbr.rel (%p149) target = $region32
    $region31: #{tpu_custom_call.1} parent=5 // pred_region
      %s153 = ssub.s32 %s16, 1
      %p154 = pneg %p37
      %p155 = pneg %p34
      %s156 = sld [smem:[#allocation6 + $0x2]]
      %s157 = sadd.s32 %s156, %s21
      %s158 = smul.u32 4, %s157
      %p159 = scmp.lt.s32.totalorder %s158, 15
      %s160 = scalar_select %p159, %s158, 15
      %s161 = smul.addr %s160, 4
      %s162 = scalar_lea.vmem %s2, %s161
      %p163 = pneg %p67
      %p164 = pneg %p64
      %p165 = pneg %p88
      %p166 = pneg %p85
      %p167 = pneg %p109
      %p168 = pneg %p106
      %s169 = sld [smem:[#allocation6 + $0x2]]
      %s170 = sadd.s32 %s169, %s21
      %s171 = smul.u32 4, %s170
      %p172 = scmp.lt.s32.totalorder %s171, 15
      %s173 = scalar_select %p172, %s171, 15
      %s174 = smul.addr %s173, 4
      %s175 = scalar_lea.vmem %s2, %s174
      %s176 = sld [smem:[#allocation6 + $0x2]]
      %s177 = sadd.s32 %s176, %s21
      %s178 = smul.u32 4, %s177
      %p180 = scmp.eq.s32.totalorder %s21, 0
      // Predicated region
      $region33: #{tpu_custom_call.1} parent=31 // pred_check
        %p181 = pneg %p180
      $region34: #{tpu_custom_call.1} parent=31 // pred_check_branch
        %183 = sbr.rel (%p181) target = $region36
      $region35: #{tpu_custom_call.1} parent=31 // pred_region
        %vm184 = vcmask 7168
        %185 = vst.msk [vmem:[#allocation2] sm:$0xff] %vm184, -inf
        %186 = vst.msk [vmem:[#allocation3] sm:$0xff] %vm184, 0.0
        %187 = vst.msk [vmem:[#allocation4] sm:$0xff] %vm184, 0.0
      $region36: #{tpu_custom_call.1} parent=31 // pred_fallthru
        _
      %s188 = sld [smem:[#allocation6]]
      %s189 = sld [smem:[#allocation6 + $0x1]]
      %s190 = sld [smem:[#allocation6 + $0x2]]
      %v191 = vld [vmem:[%s1] sm:$0xf]
      %v192 = vld [vmem:[%s175] sm:$0xf]
      %v193 = vld [vmem:[%s175 + $0x4] sm:$0xf]
      %v194 = vld [vmem:[%s175 + $0x8] sm:$0xf]
      %v195 = vld [vmem:[%s175 + $0xc] sm:$0xf]
      %v200 = vunpack.c.l.b16 %v192
      %v201 = vunpack.c.l.b16 %v193
      %v202 = vunpack.c.l.b16 %v194
      %v203 = vunpack.c.l.b16 %v195
      %v204 = vpack.c.b16 %v201, %v200
      %v205 = vpack.c.b16 %v203, %v202
      %vm206 = vcmask 261120
      %v208 = vsel %vm206, %v191, 0
      %v211 = vsel %vm206, %v204, 0
      %v214 = vsel %vm206, %v205, 0
      %216 = vmatprep.subr.bf16.mxu0 0
      %217 = vmatpush1.bf16.xpose.msra.mxu0 %v211
      %218 = vmatprep.subr.bf16.mxu0 0
      %219 = vmatpush1.bf16.xpose.msra.mxu0 %v214
      %220 = vmatprep.subr.bf16.mxu0 0
      %221 = vmatpush1.bf16.xpose.msra.mxu0 0
      %222 = vmatprep.subr.bf16.mxu0 0
      %223 = vmatpush1.bf16.xpose.msra.mxu0 0
      %224 = vmatprep.subr.bf16.mxu0 0
      %225 = vmatpush1.bf16.xpose.msra.mxu0 0
      %226 = vmatprep.subr.bf16.mxu0 0
      %227 = vmatpush1.bf16.xpose.msra.mxu0 0
      %228 = vmatprep.subr.bf16.mxu0 0
      %229 = vmatpush1.bf16.xpose.msra.mxu0 0
      %230 = vmatprep.subr.bf16.mxu0 0
      %231 = vmatpush1.bf16.xpose.msra.mxu0 0
      %232 = vmatprep.subr.bf16.mxu0 0
      %233 = vmatpush1.bf16.xpose.msra.mxu0 0
      %234 = vmatprep.subr.bf16.mxu0 0
      %235 = vmatpush1.bf16.xpose.msra.mxu0 0
      %236 = vmatprep.subr.bf16.mxu0 0
      %237 = vmatpush1.bf16.xpose.msra.mxu0 0
      %238 = vmatprep.subr.bf16.mxu0 0
      %239 = vmatpush1.bf16.xpose.msra.mxu0 0
      %240 = vmatprep.subr.bf16.mxu0 0
      %241 = vmatpush1.bf16.xpose.msra.mxu0 0
      %242 = vmatprep.subr.bf16.mxu0 0
      %243 = vmatpush1.bf16.xpose.msra.mxu0 0
      %244 = vmatprep.subr.bf16.mxu0 0
      %245 = vmatpush1.bf16.xpose.msra.mxu0 0
      %246 = vmatprep.subr.bf16.mxu0 0
      %247 = vmatpush1.bf16.xpose.msra.mxu0 0
      %248 = vmatprep.mubr.bf16.mxu0 0
      %249 = vmatmul.mubr.bf16.gmra.mrb[0].mxu0 %v208
      %v250 = vpop.f32.mrb[0].mxu0
      %v251 = vadd.f32 0.0, %v250
      %v252 = vpop.f32.mrb[0].mxu0
      %v253 = vpop.f32.mrb[0].mxu0
      %v254 = vpop.f32.mrb[0].mxu0
      %255 = vdwg.mxu0
      %v256 = vmul.f32 %v251, 20.0
      %s257 = sadd.s32 %s190, %s21
      %s258 = smul.u32 %s257, 32
      %v259 = vlaneseq
      %v260 = vand.u32 %v259, 127
      %v261 = vstv %s258
      %v262 = vadd.s32 %v261, %v260
      %v263 = vstv %s188
      %vm264 = vcmp.ge.s32.totalorder %v262, %v263
      %v265 = vstv %s189
      %vm266 = vcmp.lt.s32.totalorder %v262, %v265
      %vm267 = vmand %vm264, %vm266
      %v268 = vsel %vm267, %v256, -1e+30
      %v269 = vld [vmem:[#allocation2] sm:$0xff]
      %v270 = vsel %vm206, %v268, -inf
      %271 = vmax.xlane.f32.xlu0 %v270
      %v272 = vpop.xlane.xlu0 %271
      %v273 = vmax.f32 %v269, %v272
      %v274 = vsub.f32 %v269, %v273
      %v275 = vmul.f32 %v274, 1.442695
      %v276 = vpow.pop %v275
      %278 = vset.pattern.permute.xlu0 0
      %279 = vperm.xlu0 %278, %v273
      %v280 = vpop.permute.xlu0 %279
      %v282 = vsub.f32 %v268, %v280
      %v283 = vmul.f32 %v282, 1.442695
      %v284 = vpow.pop %v283
      %v285 = vld [vmem:[#allocation3] sm:$0xff]
      %v286 = vmul.f32 %v276, %v285
      %v287 = vsel %vm206, %v284, 0.0
      %288 = vadd.xlane.f32.xlu0 %v287
      %v289 = vpop.xlane.xlu0 %288
      %v290 = vadd.f32 %v286, %v289
      %vm291 = vcmask 7168
      %292 = vst.msk [vmem:[#allocation3] sm:$0xff] %vm291, %v290
      %293 = vst.msk [vmem:[#allocation2] sm:$0xff] %vm291, %v273
      %v294 = vld [vmem:[#allocation4] sm:$0xff]
      %v295 = vld [vmem:[%s3] sm:$0xff]
      %296 = vset.pattern.permute.xlu0 0
      %297 = vperm.xlu0 %296, %v295
      %v298 = vpop.permute.xlu0 %297
      %vm299 = vcmp.eq.s32.totalorder %v262, %v298
      %v300 = vsel %vm299, %v256, 0.0
      %v301 = vsel %vm206, %v300, 0.0
      %302 = vadd.xlane.f32.xlu0 %v301
      %v303 = vpop.xlane.xlu0 %302
      %v304 = vadd.f32 %v294, %v303
      %305 = vst.msk [vmem:[#allocation4] sm:$0xff] %vm291, %v304
      %p306 = scmp.eq.s32.totalorder %s21, 1
      // Predicated region
      $region37: #{tpu_custom_call.1} parent=31 // pred_check
        %p307 = pneg %p306
      $region38: #{tpu_custom_call.1} parent=31 // pred_check_branch
        %309 = sbr.rel (%p307) target = $region40
      $region39: #{tpu_custom_call.1} parent=31 // pred_region
        %v310 = vld [vmem:[#allocation2] sm:$0xff]
        %v311 = vld [vmem:[#allocation3] sm:$0xff]
        %v312 = vlog2.pop %v311
        %v313 = vmul.f32 %v312, 0.6931472
        %v314 = vadd.f32 %v310, %v313
        %v315 = vld [vmem:[#allocation4] sm:$0xff]
        %v316 = vsub.f32 %v314, %v315
        %317 = vst.msk [vmem:[%s4] sm:$0xff] %vm291, %v316
      $region40: #{tpu_custom_call.1} parent=31 // pred_fallthru
        _
      // Predicated region
      $region41: #{tpu_custom_call.1} parent=31 // pred_check
        %p318 = pneg %p106
      $region42: #{tpu_custom_call.1} parent=31 // pred_check_branch
        %320 = sbr.rel (%p318) target = $region44
      $region43: #{tpu_custom_call.1} parent=31 // pred_region
        _
      $region44: #{tpu_custom_call.1} parent=31 // pred_fallthru
        _
      // Predicated region
      $region45: #{tpu_custom_call.1} parent=31 // pred_check
        %p321 = pneg %p106
      $region46: #{tpu_custom_call.1} parent=31 // pred_check_branch
        %323 = sbr.rel (%p321) target = $region48
      $region47: #{tpu_custom_call.1} parent=31 // pred_region
        _
      $region48: #{tpu_custom_call.1} parent=31 // pred_fallthru
        _
    $region32: #{tpu_custom_call.1} parent=5 // pred_fallthru
      _
    %p324 = scmp.le.s32.totalorder 2, %s16
    // Predicated region
    $region49: #{tpu_custom_call.1} parent=5 // pred_check
      %p325 = pneg %p324
    $region50: #{tpu_custom_call.1} parent=5 // pred_check_branch
      %327 = sbr.rel (%p325) target = $region52
    $region51: #{tpu_custom_call.1} parent=5 // pred_region
      %s328 = ssub.s32 %s16, 2
    $region52: #{tpu_custom_call.1} parent=5 // pred_fallthru
      _
  $region6: #{tpu_custom_call.1} parent=0 // loop_footer
    %s20 = sadd.s32 1, %s16
  $region7: #{tpu_custom_call.1} parent=0 // loop_footer_branch
    %15 = sbr.rel target = $region3
  $region8: #{tpu_custom_call.1} parent=0 // loop_exit
    _

</llo_original>
